<compile_context>
chip_gen: v7x
topology: tpu7x:2x2x1
jax: 0.10.0
libtpu: 0.0.40
codegen_flags: <defaults>
</compile_context>

<pallas_src>
import math
import functools

import jax
import jax.numpy as jnp
import numpy as np
from jax.experimental import pallas as pl
from jax.experimental.pallas import tpu as pltpu


# ----------------------------------------------------------------------------
# Pallas kernel: TB batch elements per grid step.
# ----------------------------------------------------------------------------
def st_att_kernel(x_ref, pe_ref, bias_ref,
                  wqkv_ref, bqkv_ref,
                  wo_ref, bo_ref, a2_ref, b2_ref,
                  out_ref,
                  *, att_heads, latent_dim, eps):
    TB, S, D = x_ref.shape
    H, L = att_heads, latent_dim
    HL = H * L
    O = a2_ref.shape[-1]

    # ---- positional encoding (broadcast over the TB rows of this block) -----
    x = x_ref[...] + pe_ref[...][None]                     # (TB, S, D) f32
    # Flatten so the projection matmul sees M = TB*S rows.
    x2 = x.reshape(TB * S, D).astype(jnp.bfloat16)

    # ---- fused Q/K/V projection: one matmul with N = 3*HL -------------------
    # (scale 1/sqrt(L) already folded into the q-columns of wqkv/bqkv on host;
    #  dropout = identity)
    qkv = jnp.dot(x2, wqkv_ref[...],
                  preferred_element_type=jnp.float32) + bqkv_ref[...]   # (TB*S, 3HL) f32

    # cast to bf16 ONCE (keeps only the f32 softmax / LN math in f32)
    q = qkv[:, 0 * HL:1 * HL].astype(jnp.bfloat16)
    k = qkv[:, 1 * HL:2 * HL].astype(jnp.bfloat16)
    v = jnp.maximum(qkv[:, 2 * HL:3 * HL], 0.0).astype(jnp.bfloat16)    # ReLU in value_map

    # ---- heads -> batch axis so attention is ONE batched contraction --------
    # (head-major ordering on axis 0; undone symmetrically below)
    def heads_to_batch(a):
        a3 = a.reshape(TB, S, HL)
        return jnp.concatenate([a3[:, :, h * L:(h + 1) * L] for h in range(H)],
                               axis=0)                     # (H*TB, S, L)

    qh = heads_to_batch(q)
    kh = heads_to_batch(k)
    vh = heads_to_batch(v)

    bias = bias_ref[...][None]                             # (1, S, S) additive mask

    # ---- scaled-dot-product attention, batched over H*TB --------------------
    s = jnp.einsum('bqd,bkd->bqk', qh, kh,
                   preferred_element_type=jnp.float32) + bias           # (H*TB, S, S)
    s = s - jnp.max(s, axis=-1, keepdims=True)
    p = jnp.exp(s)
    p = p * pl.reciprocal(jnp.sum(p, axis=-1, keepdims=True), approx=True)

    ctx = jnp.einsum('bqk,bkd->bqd', p.astype(jnp.bfloat16), vh,
                     preferred_element_type=jnp.float32)                # (H*TB, S, L)

    # batch axis -> heads back on the lane axis: (TB*S, HL)
    ctx = jnp.concatenate([ctx[h * TB:(h + 1) * TB] for h in range(H)], axis=-1)
    ctx = ctx.reshape(TB * S, HL).astype(jnp.bfloat16)

    # ---- ft_map: Linear -> ReLU -> LayerNorm (dropout = identity) -----------
    y = jnp.dot(ctx, wo_ref[...], preferred_element_type=jnp.float32) + bo_ref[...]
    y = jnp.maximum(y, 0.0)
    mean = jnp.mean(y, axis=-1, keepdims=True)
    var = jnp.sum((y - mean) ** 2, axis=-1, keepdims=True) / (O - 1)   # torch.std (ddof=1)
    inv = 1.0 / (jnp.sqrt(var) + eps)          # exact reciprocal for LN accuracy
    out = a2_ref[...] * (y - mean) * inv + b2_ref[...]                  # (TB*S, O) f32

    # ---- lane-dense pack: (TB*S, O) -> (TB, S*O) -----------------------------
    # Built from squeeze + lane-concat (instead of a minor-dim-merging reshape)
    # so every op has a known-good Mosaic lowering; the output block is S*O
    # lanes wide => unmasked stores / dense output DMA.
    out3 = out.reshape(TB, S, O)
    dense = jnp.concatenate([out3[:, i, :] for i in range(S)], axis=-1)  # (TB, S*O)
    out_ref[:, 0, :] = dense.astype(out_ref.dtype)


# ----------------------------------------------------------------------------
# Wrapper
# ----------------------------------------------------------------------------
def _pick_block_batch(B, S, target_rows=512, min_grid_steps=2):
    """Largest divisor TB of B with TB*S <= target_rows, while keeping the
    parallel grid at least `min_grid_steps` long (so both v7x TensorCores get
    work) whenever the batch allows it."""
    min_steps = min(min_grid_steps, B)
    best = 1
    for cand in range(1, B + 1):
        if B % cand == 0 and cand * S <= target_rows and B // cand >= min_steps:
            best = cand
    return best


def st_att_layer(x, pe, mask, params, *, att_heads, latent_dim, eps=1e-6,
                 block_batch=None, target_rows=512):
    B, S, D = x.shape
    HL = att_heads * latent_dim
    O = params["wo"].shape[1]

    TB = block_batch if block_batch is not None else _pick_block_batch(B, S, target_rows)
    assert B % TB == 0, "block batch must divide the batch size"

    # additive mask bias: scores + bias  ==  scores*mask + (1-mask)*(-9e15)
    mask_bias = ((1.0 - mask) * jnp.float32(-9e15)).astype(jnp.float32)

    # Fused QKV weights (bf16 for the MXU), with 1/sqrt(L) folded into Wq/bq.
    scale = 1.0 / math.sqrt(latent_dim)
    wqkv = jnp.concatenate(
        [params["wq"] * scale, params["wk"], params["wv"]], axis=1).astype(jnp.bfloat16)
    bqkv = jnp.concatenate(
        [params["bq"] * scale, params["bk"], params["bv"]], axis=1).astype(jnp.float32)
    wo = params["wo"].astype(jnp.bfloat16)

    kern = functools.partial(st_att_kernel,
                             att_heads=att_heads,
                             latent_dim=latent_dim,
                             eps=eps)

    def rep(shape):  # grid-invariant (replicated) operand
        return pl.BlockSpec(shape, lambda b, _n=len(shape): (0,) * _n)

    out = pl.pallas_call(
        kern,
        # lane-dense output slab (B, 1, S*O); reshaped to (B, S, O) below
        out_shape=jax.ShapeDtypeStruct((B, 1, S * O), jnp.float32),
        grid_spec=pltpu.PrefetchScalarGridSpec(
            num_scalar_prefetch=0,
            grid=(B // TB,),
            in_specs=[
                pl.BlockSpec((TB, S, D), lambda b: (b, 0, 0)),   # x
                rep((S, D)),                                     # pe
                rep((S, S)),                                     # additive mask bias
                rep((D, 3 * HL)),                                # fused Wqkv (bf16)
                rep((1, 3 * HL)),                                # fused bqkv
                rep((HL, O)),                                    # Wo (bf16)
                rep((1, O)),                                     # bo
                rep((1, O)),                                     # a_2
                rep((1, O)),                                     # b_2
            ],
            out_specs=pl.BlockSpec((TB, 1, S * O), lambda b: (b, 0, 0)),
        ),
        compiler_params=pltpu.CompilerParams(
            dimension_semantics=("parallel",),
            vmem_limit_bytes=48 * 1024 * 1024),
    )(x, pe, mask_bias, wqkv, bqkv, wo, params["bo"], params["a2"], params["b2"])

    return out.reshape(B, S, O)


# ----------------------------------------------------------------------------
# Buffers (positional encoding, domain mask) — plain numpy glue
# ----------------------------------------------------------------------------
def make_positional_encoding(ft_size, time_len, joint_num, domain):
    if domain == "temporal":
        pos_list = list(range(joint_num * time_len))
    elif domain == "spatial":
        pos_list = [j for _t in range(time_len) for j in range(joint_num)]
    else:
        raise ValueError(domain)
    position = np.asarray(pos_list, dtype=np.float32)[:, None]
    pe = np.zeros((time_len * joint_num, ft_size), dtype=np.float32)
    div_term = np.exp(np.arange(0, ft_size, 2, dtype=np.float32)
                      * -(math.log(10000.0) / ft_size))
    pe[:, 0::2] = np.sin(position * div_term)
    pe[:, 1::2] = np.cos(position * div_term)
    return jnp.asarray(pe)


def make_domain_masks(time_len, joint_num):
    n = time_len * joint_num
    t_mask = np.ones((n, n), dtype=np.float32)
    for i in range(time_len):
        r = i * joint_num
        t_mask[r:r + joint_num, r:r + joint_num] = 0.0
    s_mask = 1.0 - t_mask
    t_mask = t_mask + np.eye(n, dtype=np.float32)
    return jnp.asarray(t_mask), jnp.asarray(s_mask)


# ----------------------------------------------------------------------------
# Deterministic parameter init (xavier-uniform weights, zero bias)
# ----------------------------------------------------------------------------
def xavier_uniform(key, fan_in, fan_out):
    bound = math.sqrt(6.0 / (fan_in + fan_out))
    return jax.random.uniform(key, (fan_in, fan_out), jnp.float32, -bound, bound)


def init_params(key, input_size, output_size, att_heads, latent_dim):
    HL = att_heads * latent_dim
    ks = jax.random.split(key, 4)
    return {
        "wq": xavier_uniform(ks[0], input_size, HL),
        "bq": jnp.zeros((1, HL), jnp.float32),
        "wk": xavier_uniform(ks[1], input_size, HL),
        "bk": jnp.zeros((1, HL), jnp.float32),
        "wv": xavier_uniform(ks[2], input_size, HL),
        "bv": jnp.zeros((1, HL), jnp.float32),
        "wo": xavier_uniform(ks[3], HL, output_size),
        "bo": jnp.zeros((1, output_size), jnp.float32),
        "a2": jnp.ones((1, output_size), jnp.float32),
        "b2": jnp.zeros((1, output_size), jnp.float32),
    }


# ----------------------------------------------------------------------------
# Pure-JAX reference.  matmul_dtype=jnp.bfloat16 mirrors the kernel's MXU
# precision so the check validates the kernel structure; f32 gives the exact
# PyTorch-module math.
# ----------------------------------------------------------------------------
def ref_forward(x, pe, mask, params, *, att_heads, latent_dim, eps=1e-6,
                matmul_dtype=jnp.float32):
    B, S, D = x.shape
    L = latent_dim
    md = matmul_dtype

    def mm(a, w):
        return jnp.dot(a.astype(md), w.astype(md),
                       preferred_element_type=jnp.float32)

    x = x + pe[None]
    q = (mm(x, params["wq"]) + params["bq"]) / math.sqrt(L)
    k = mm(x, params["wk"]) + params["bk"]
    v = jnp.maximum(mm(x, params["wv"]) + params["bv"], 0.0)

    def split(a):  # (B,S,H*L) -> (B,H,S,L)
        return a.reshape(B, S, att_heads, L).transpose(0, 2, 1, 3)
    q, k, v = split(q), split(k), split(v)

    scores = jnp.einsum("bhqd,bhkd->bhqk", q.astype(md), k.astype(md),
                        preferred_element_type=jnp.float32)
    scores = scores + (1.0 - mask) * (-9e15)
    p = jax.nn.softmax(scores, axis=-1)
    ctx = jnp.einsum("bhqk,bhkd->bhqd", p.astype(md), v.astype(md),
                     preferred_element_type=jnp.float32)
    ctx = ctx.transpose(0, 2, 1, 3).reshape(B, S, att_heads * L)

    y = jnp.maximum(mm(ctx, params["wo"]) + params["bo"], 0.0)
    mean = y.mean(-1, keepdims=True)
    std = jnp.sqrt(jnp.sum((y - mean) ** 2, -1, keepdims=True) / (y.shape[-1] - 1))
    return params["a2"] * (y - mean) / (std + eps) + params["b2"]


# ----------------------------------------------------------------------------
if __name__ == "__main__":
    # Module hyperparameters (small, consistent with the PyTorch forward)
    input_size = 32
    output_size = 32
    att_heads = 2
    latent_dim = 16
    time_len = 2
    joint_num = 4
    domain = "temporal"
    batch = 2
    seq = time_len * joint_num          # S = 8, S*O = 256 lanes

    key = jax.random.PRNGKey(0)
    k_x, k_p = jax.random.split(key)
    x = jax.random.normal(k_x, (batch, seq, input_size), jnp.float32)

    pe = make_positional_encoding(input_size, time_len, joint_num, domain)
    t_mask, s_mask = make_domain_masks(time_len, joint_num)
    mask = t_mask if domain == "temporal" else s_mask

    params = init_params(k_p, input_size, output_size, att_heads, latent_dim)

    out = st_att_layer(x, pe, mask, params,
                       att_heads=att_heads, latent_dim=latent_dim)
    out = jax.block_until_ready(out)

    # bf16-matmul reference mirrors the kernel's MXU precision; tolerance
    # covers the approx-reciprocal (EUP) softmax denominator.
    ref = ref_forward(x, pe, mask, params,
                      att_heads=att_heads, latent_dim=latent_dim,
                      matmul_dtype=jnp.bfloat16)
    np.testing.assert_allclose(np.asarray(out), np.asarray(ref),
                               rtol=2e-2, atol=2e-2)

    print("KERNEL_OK")
</pallas_src>

<mosaic_0001>
module attributes {stable_mosaic.version = 11 : i64} {
  func.func @st_att_kernel(%arg0: i32, %arg1: memref<1x8x32xf32, #tpu.memory_space<vmem>>, %arg2: memref<8x32xf32, #tpu.memory_space<vmem>>, %arg3: memref<8x8xf32, #tpu.memory_space<vmem>>, %arg4: memref<32x96xbf16, #tpu.memory_space<vmem>>, %arg5: memref<1x96xf32, #tpu.memory_space<vmem>>, %arg6: memref<32x32xbf16, #tpu.memory_space<vmem>>, %arg7: memref<1x32xf32, #tpu.memory_space<vmem>>, %arg8: memref<1x32xf32, #tpu.memory_space<vmem>>, %arg9: memref<1x32xf32, #tpu.memory_space<vmem>>, %arg10: memref<1x1x256xf32, #tpu.memory_space<vmem>>) attributes {dimension_semantics = [#tpu.dimension_semantics<parallel>], iteration_bounds = array<i64: 2>, scalar_prefetch = 0 : i64, scratch_operands = 0 : i64, tpu.core_type = #tpu.core_type<tc>, window_params = [{transform_indices = @transform_0, window_bounds = array<i64: 1, 8, 32>}, {pipeline_mode = #tpu.pipeline_mode<synchronous>, transform_indices = @transform_1, window_bounds = array<i64: 8, 32>}, {pipeline_mode = #tpu.pipeline_mode<synchronous>, transform_indices = @transform_2, window_bounds = array<i64: 8, 8>}, {pipeline_mode = #tpu.pipeline_mode<synchronous>, transform_indices = @transform_3, window_bounds = array<i64: 32, 96>}, {pipeline_mode = #tpu.pipeline_mode<synchronous>, transform_indices = @transform_4, window_bounds = array<i64: 1, 96>}, {pipeline_mode = #tpu.pipeline_mode<synchronous>, transform_indices = @transform_5, window_bounds = array<i64: 32, 32>}, {pipeline_mode = #tpu.pipeline_mode<synchronous>, transform_indices = @transform_6, window_bounds = array<i64: 1, 32>}, {pipeline_mode = #tpu.pipeline_mode<synchronous>, transform_indices = @transform_7, window_bounds = array<i64: 1, 32>}, {pipeline_mode = #tpu.pipeline_mode<synchronous>, transform_indices = @transform_8, window_bounds = array<i64: 1, 32>}, {transform_indices = @transform_9, window_bounds = array<i64: 1, 1, 256>}]} {
    %c0 = arith.constant 0 : index
    %c0_0 = arith.constant 0 : index
    %c0_1 = arith.constant 0 : index
    %0 = vector.load %arg1[%c0, %c0_0, %c0_1] : memref<1x8x32xf32, #tpu.memory_space<vmem>>, vector<1x8x32xf32>
    %c0_2 = arith.constant 0 : index
    %c0_3 = arith.constant 0 : index
    %1 = vector.load %arg2[%c0_2, %c0_3] : memref<8x32xf32, #tpu.memory_space<vmem>>, vector<8x32xf32>
    %2 = vector.shape_cast %1 : vector<8x32xf32> to vector<1x8x32xf32>
    %3 = arith.addf %0, %2 : vector<1x8x32xf32>
    %4 = vector.shape_cast %3 : vector<1x8x32xf32> to vector<8x32xf32>
    %5 = arith.truncf %4 : vector<8x32xf32> to vector<8x32xbf16>
    %c0_4 = arith.constant 0 : index
    %c0_5 = arith.constant 0 : index
    %6 = vector.load %arg4[%c0_4, %c0_5] : memref<32x96xbf16, #tpu.memory_space<vmem>>, vector<32x96xbf16>
    %cst = arith.constant dense<0.000000e+00> : vector<8x96xf32>
    %7 = tpu.matmul %5, %6, %cst {dimension_numbers = #tpu.dot_dimension_numbers<[1], [0], [0], [1], [0, 0, 1, 1], [], []>} : vector<8x32xbf16>, vector<32x96xbf16>, vector<8x96xf32> -> vector<8x96xf32>
    %c0_6 = arith.constant 0 : index
    %c0_7 = arith.constant 0 : index
    %8 = vector.load %arg5[%c0_6, %c0_7] : memref<1x96xf32, #tpu.memory_space<vmem>>, vector<1x96xf32>
    %9 = vector.broadcast %8 : vector<1x96xf32> to vector<8x96xf32>
    %10 = arith.addf %7, %9 : vector<8x96xf32>
    %11 = vector.extract_strided_slice %10 {offsets = [0, 0], sizes = [8, 32], strides = [1, 1]} : vector<8x96xf32> to vector<8x32xf32>
    %12 = arith.truncf %11 : vector<8x32xf32> to vector<8x32xbf16>
    %13 = vector.extract_strided_slice %10 {offsets = [0, 32], sizes = [8, 32], strides = [1, 1]} : vector<8x96xf32> to vector<8x32xf32>
    %14 = arith.truncf %13 : vector<8x32xf32> to vector<8x32xbf16>
    %15 = vector.extract_strided_slice %10 {offsets = [0, 64], sizes = [8, 32], strides = [1, 1]} : vector<8x96xf32> to vector<8x32xf32>
    %cst_8 = arith.constant 0.000000e+00 : f32
    %16 = vector.broadcast %cst_8 : f32 to vector<8x32xf32>
    %17 = arith.maximumf %15, %16 : vector<8x32xf32>
    %18 = arith.truncf %17 : vector<8x32xf32> to vector<8x32xbf16>
    %19 = vector.shape_cast %12 : vector<8x32xbf16> to vector<1x8x32xbf16>
    %20 = vector.extract_strided_slice %19 {offsets = [0, 0, 0], sizes = [1, 8, 16], strides = [1, 1, 1]} : vector<1x8x32xbf16> to vector<1x8x16xbf16>
    %21 = vector.extract_strided_slice %19 {offsets = [0, 0, 16], sizes = [1, 8, 16], strides = [1, 1, 1]} : vector<1x8x32xbf16> to vector<1x8x16xbf16>
    %22 = tpu.concatenate %20, %21 in 0 : vector<1x8x16xbf16>, vector<1x8x16xbf16> -> vector<2x8x16xbf16>
    %23 = vector.shape_cast %14 : vector<8x32xbf16> to vector<1x8x32xbf16>
    %24 = vector.extract_strided_slice %23 {offsets = [0, 0, 0], sizes = [1, 8, 16], strides = [1, 1, 1]} : vector<1x8x32xbf16> to vector<1x8x16xbf16>
    %25 = vector.extract_strided_slice %23 {offsets = [0, 0, 16], sizes = [1, 8, 16], strides = [1, 1, 1]} : vector<1x8x32xbf16> to vector<1x8x16xbf16>
    %26 = tpu.concatenate %24, %25 in 0 : vector<1x8x16xbf16>, vector<1x8x16xbf16> -> vector<2x8x16xbf16>
    %27 = vector.shape_cast %18 : vector<8x32xbf16> to vector<1x8x32xbf16>
    %28 = vector.extract_strided_slice %27 {offsets = [0, 0, 0], sizes = [1, 8, 16], strides = [1, 1, 1]} : vector<1x8x32xbf16> to vector<1x8x16xbf16>
    %29 = vector.extract_strided_slice %27 {offsets = [0, 0, 16], sizes = [1, 8, 16], strides = [1, 1, 1]} : vector<1x8x32xbf16> to vector<1x8x16xbf16>
    %30 = tpu.concatenate %28, %29 in 0 : vector<1x8x16xbf16>, vector<1x8x16xbf16> -> vector<2x8x16xbf16>
    %c0_9 = arith.constant 0 : index
    %c0_10 = arith.constant 0 : index
    %31 = vector.load %arg3[%c0_9, %c0_10] : memref<8x8xf32, #tpu.memory_space<vmem>>, vector<8x8xf32>
    %32 = vector.shape_cast %31 : vector<8x8xf32> to vector<1x8x8xf32>
    "tpu.trace_start"() <{level = 10 : i32, message = "bqd,bkd->bqk"}> : () -> ()
    %cst_11 = arith.constant dense<0.000000e+00> : vector<2x8x8xf32>
    %33 = tpu.matmul %22, %26, %cst_11 {dimension_numbers = #tpu.dot_dimension_numbers<[2], [2], [1], [1], [0, 0, 0, 1, 1, 1], [0], [0]>} : vector<2x8x16xbf16>, vector<2x8x16xbf16>, vector<2x8x8xf32> -> vector<2x8x8xf32>
    "tpu.trace_stop"() : () -> ()
    %34 = vector.broadcast %32 : vector<1x8x8xf32> to vector<2x8x8xf32>
    %35 = arith.addf %33, %34 : vector<2x8x8xf32>
    %cst_12 = arith.constant dense<0xFF800000> : vector<2x8xf32>
    %36 = vector.multi_reduction <maximumf>, %35, %cst_12 [2] : vector<2x8x8xf32> to vector<2x8xf32>
    %37 = vector.shape_cast %36 : vector<2x8xf32> to vector<2x8x1xf32>
    %38 = vector.broadcast %37 : vector<2x8x1xf32> to vector<2x8x8xf32>
    %39 = arith.subf %35, %38 : vector<2x8x8xf32>
    %40 = math.exp %39 : vector<2x8x8xf32>
    %cst_13 = arith.constant dense<0.000000e+00> : vector<2x8xf32>
    %41 = vector.multi_reduction <add>, %40, %cst_13 [2] : vector<2x8x8xf32> to vector<2x8xf32>
    %42 = vector.shape_cast %41 : vector<2x8xf32> to vector<2x8x1xf32>
    %43 = tpu.reciprocal %42 {approx = true} : vector<2x8x1xf32> -> vector<2x8x1xf32>
    %44 = vector.broadcast %43 : vector<2x8x1xf32> to vector<2x8x8xf32>
    %45 = arith.mulf %40, %44 : vector<2x8x8xf32>
    %46 = arith.truncf %45 : vector<2x8x8xf32> to vector<2x8x8xbf16>
    "tpu.trace_start"() <{level = 10 : i32, message = "bqk,bkd->bqd"}> : () -> ()
    %cst_14 = arith.constant dense<0.000000e+00> : vector<2x8x16xf32>
    %47 = tpu.matmul %46, %30, %cst_14 {dimension_numbers = #tpu.dot_dimension_numbers<[2], [1], [1], [2], [0, 0, 0, 1, 1, 2], [0], [0]>} : vector<2x8x8xbf16>, vector<2x8x16xbf16>, vector<2x8x16xf32> -> vector<2x8x16xf32>
    "tpu.trace_stop"() : () -> ()
    %48 = vector.extract_strided_slice %47 {offsets = [0, 0, 0], sizes = [1, 8, 16], strides = [1, 1, 1]} : vector<2x8x16xf32> to vector<1x8x16xf32>
    %49 = vector.extract_strided_slice %47 {offsets = [1, 0, 0], sizes = [1, 8, 16], strides = [1, 1, 1]} : vector<2x8x16xf32> to vector<1x8x16xf32>
    %50 = tpu.concatenate %48, %49 in 2 : vector<1x8x16xf32>, vector<1x8x16xf32> -> vector<1x8x32xf32>
    %51 = vector.shape_cast %50 : vector<1x8x32xf32> to vector<8x32xf32>
    %52 = arith.truncf %51 : vector<8x32xf32> to vector<8x32xbf16>
    %c0_15 = arith.constant 0 : index
    %c0_16 = arith.constant 0 : index
    %53 = vector.load %arg6[%c0_15, %c0_16] : memref<32x32xbf16, #tpu.memory_space<vmem>>, vector<32x32xbf16>
    %cst_17 = arith.constant dense<0.000000e+00> : vector<8x32xf32>
    %54 = tpu.matmul %52, %53, %cst_17 {dimension_numbers = #tpu.dot_dimension_numbers<[1], [0], [0], [1], [0, 0, 1, 1], [], []>} : vector<8x32xbf16>, vector<32x32xbf16>, vector<8x32xf32> -> vector<8x32xf32>
    %c0_18 = arith.constant 0 : index
    %c0_19 = arith.constant 0 : index
    %55 = vector.load %arg7[%c0_18, %c0_19] : memref<1x32xf32, #tpu.memory_space<vmem>>, vector<1x32xf32>
    %56 = vector.broadcast %55 : vector<1x32xf32> to vector<8x32xf32>
    %57 = arith.addf %54, %56 : vector<8x32xf32>
    %cst_20 = arith.constant 0.000000e+00 : f32
    %58 = vector.broadcast %cst_20 : f32 to vector<8x32xf32>
    %59 = arith.maximumf %57, %58 : vector<8x32xf32>
    %cst_21 = arith.constant dense<0.000000e+00> : vector<8xf32>
    %60 = vector.multi_reduction <add>, %59, %cst_21 [1] : vector<8x32xf32> to vector<8xf32>
    %61 = vector.shape_cast %60 : vector<8xf32> to vector<8x1xf32>
    %cst_22 = arith.constant 3.200000e+01 : f32
    %62 = vector.broadcast %cst_22 : f32 to vector<8x1xf32>
    %63 = arith.divf %61, %62 : vector<8x1xf32>
    %64 = vector.broadcast %63 : vector<8x1xf32> to vector<8x32xf32>
    %65 = arith.subf %59, %64 : vector<8x32xf32>
    %66 = arith.mulf %65, %65 : vector<8x32xf32>
    %cst_23 = arith.constant dense<0.000000e+00> : vector<8xf32>
    %67 = vector.multi_reduction <add>, %66, %cst_23 [1] : vector<8x32xf32> to vector<8xf32>
    %68 = vector.shape_cast %67 : vector<8xf32> to vector<8x1xf32>
    %cst_24 = arith.constant 3.100000e+01 : f32
    %69 = vector.broadcast %cst_24 : f32 to vector<8x1xf32>
    %70 = arith.divf %68, %69 : vector<8x1xf32>
    %71 = math.sqrt %70 : vector<8x1xf32>
    %cst_25 = arith.constant 9.99999997E-7 : f32
    %72 = vector.broadcast %cst_25 : f32 to vector<8x1xf32>
    %73 = arith.addf %71, %72 : vector<8x1xf32>
    %cst_26 = arith.constant 1.000000e+00 : f32
    %74 = vector.broadcast %cst_26 : f32 to vector<8x1xf32>
    %75 = arith.divf %74, %73 : vector<8x1xf32>
    %c0_27 = arith.constant 0 : index
    %c0_28 = arith.constant 0 : index
    %76 = vector.load %arg8[%c0_27, %c0_28] : memref<1x32xf32, #tpu.memory_space<vmem>>, vector<1x32xf32>
    %77 = vector.broadcast %63 : vector<8x1xf32> to vector<8x32xf32>
    %78 = arith.subf %59, %77 : vector<8x32xf32>
    %79 = vector.broadcast %76 : vector<1x32xf32> to vector<8x32xf32>
    %80 = arith.mulf %79, %78 : vector<8x32xf32>
    %81 = vector.broadcast %75 : vector<8x1xf32> to vector<8x32xf32>
    %82 = arith.mulf %80, %81 : vector<8x32xf32>
    %c0_29 = arith.constant 0 : index
    %c0_30 = arith.constant 0 : index
    %83 = vector.load %arg9[%c0_29, %c0_30] : memref<1x32xf32, #tpu.memory_space<vmem>>, vector<1x32xf32>
    %84 = vector.broadcast %83 : vector<1x32xf32> to vector<8x32xf32>
    %85 = arith.addf %82, %84 : vector<8x32xf32>
    %86 = vector.shape_cast %85 : vector<8x32xf32> to vector<1x8x32xf32>
    %87 = vector.extract_strided_slice %86 {offsets = [0, 0, 0], sizes = [1, 1, 32], strides = [1, 1, 1]} : vector<1x8x32xf32> to vector<1x1x32xf32>
    %88 = vector.shape_cast %87 : vector<1x1x32xf32> to vector<1x32xf32>
    %89 = vector.extract_strided_slice %86 {offsets = [0, 1, 0], sizes = [1, 1, 32], strides = [1, 1, 1]} : vector<1x8x32xf32> to vector<1x1x32xf32>
    %90 = vector.shape_cast %89 : vector<1x1x32xf32> to vector<1x32xf32>
    %91 = vector.extract_strided_slice %86 {offsets = [0, 2, 0], sizes = [1, 1, 32], strides = [1, 1, 1]} : vector<1x8x32xf32> to vector<1x1x32xf32>
    %92 = vector.shape_cast %91 : vector<1x1x32xf32> to vector<1x32xf32>
    %93 = vector.extract_strided_slice %86 {offsets = [0, 3, 0], sizes = [1, 1, 32], strides = [1, 1, 1]} : vector<1x8x32xf32> to vector<1x1x32xf32>
    %94 = vector.shape_cast %93 : vector<1x1x32xf32> to vector<1x32xf32>
    %95 = vector.extract_strided_slice %86 {offsets = [0, 4, 0], sizes = [1, 1, 32], strides = [1, 1, 1]} : vector<1x8x32xf32> to vector<1x1x32xf32>
    %96 = vector.shape_cast %95 : vector<1x1x32xf32> to vector<1x32xf32>
    %97 = vector.extract_strided_slice %86 {offsets = [0, 5, 0], sizes = [1, 1, 32], strides = [1, 1, 1]} : vector<1x8x32xf32> to vector<1x1x32xf32>
    %98 = vector.shape_cast %97 : vector<1x1x32xf32> to vector<1x32xf32>
    %99 = vector.extract_strided_slice %86 {offsets = [0, 6, 0], sizes = [1, 1, 32], strides = [1, 1, 1]} : vector<1x8x32xf32> to vector<1x1x32xf32>
    %100 = vector.shape_cast %99 : vector<1x1x32xf32> to vector<1x32xf32>
    %101 = vector.extract_strided_slice %86 {offsets = [0, 7, 0], sizes = [1, 1, 32], strides = [1, 1, 1]} : vector<1x8x32xf32> to vector<1x1x32xf32>
    %102 = vector.shape_cast %101 : vector<1x1x32xf32> to vector<1x32xf32>
    %103 = tpu.concatenate %88, %90, %92, %94, %96, %98, %100, %102 in 1 : vector<1x32xf32>, vector<1x32xf32>, vector<1x32xf32>, vector<1x32xf32>, vector<1x32xf32>, vector<1x32xf32>, vector<1x32xf32>, vector<1x32xf32> -> vector<1x256xf32>
    %c0_31 = arith.constant 0 : index
    %c0_32 = arith.constant 0 : index
    %c0_33 = arith.constant 0 : index
    %104 = vector.load %arg10[%c0_31, %c0_32, %c0_33] : memref<1x1x256xf32, #tpu.memory_space<vmem>>, vector<1x1x256xf32>
    %105 = vector.shape_cast %104 : vector<1x1x256xf32> to vector<1x256xf32>
    %106 = vector.shape_cast %103 : vector<1x256xf32> to vector<1x1x256xf32>
    tpu.vector_store %arg10[%c0_31, %c0_32, %c0_33], %106 {strides = array<i32>} : memref<1x1x256xf32, #tpu.memory_space<vmem>>, vector<1x1x256xf32>,
    return
  }
  func.func @transform_0(%arg0: i32) -> (i32, i32, i32) {
    %c0_i32 = arith.constant 0 : i32
    %c0_i32_0 = arith.constant 0 : i32
    %c0_i32_1 = arith.constant 0 : i32
    return %arg0, %c0_i32, %c0_i32_0 : i32, i32, i32
  }
  func.func @transform_1(%arg0: i32) -> (i32, i32) {
    %c0_i32 = arith.constant 0 : i32
    %c0_i32_0 = arith.constant 0 : i32
    %c0_i32_1 = arith.constant 0 : i32
    return %c0_i32, %c0_i32_0 : i32, i32
  }
  func.func @transform_2(%arg0: i32) -> (i32, i32) {
    %c0_i32 = arith.constant 0 : i32
    %c0_i32_0 = arith.constant 0 : i32
    %c0_i32_1 = arith.constant 0 : i32
    return %c0_i32, %c0_i32_0 : i32, i32
  }
  func.func @transform_3(%arg0: i32) -> (i32, i32) {
    %c0_i32 = arith.constant 0 : i32
    %c0_i32_0 = arith.constant 0 : i32
    %c0_i32_1 = arith.constant 0 : i32
    return %c0_i32, %c0_i32_0 : i32, i32
  }
  func.func @transform_4(%arg0: i32) -> (i32, i32) {
    %c0_i32 = arith.constant 0 : i32
    %c0_i32_0 = arith.constant 0 : i32
    %c0_i32_1 = arith.constant 0 : i32
    return %c0_i32, %c0_i32_0 : i32, i32
  }
  func.func @transform_5(%arg0: i32) -> (i32, i32) {
    %c0_i32 = arith.constant 0 : i32
    %c0_i32_0 = arith.constant 0 : i32
    %c0_i32_1 = arith.constant 0 : i32
    return %c0_i32, %c0_i32_0 : i32, i32
  }
  func.func @transform_6(%arg0: i32) -> (i32, i32) {
    %c0_i32 = arith.constant 0 : i32
    %c0_i32_0 = arith.constant 0 : i32
    %c0_i32_1 = arith.constant 0 : i32
    return %c0_i32, %c0_i32_0 : i32, i32
  }
  func.func @transform_7(%arg0: i32) -> (i32, i32) {
    %c0_i32 = arith.constant 0 : i32
    %c0_i32_0 = arith.constant 0 : i32
    %c0_i32_1 = arith.constant 0 : i32
    return %c0_i32, %c0_i32_0 : i32, i32
  }
  func.func @transform_8(%arg0: i32) -> (i32, i32) {
    %c0_i32 = arith.constant 0 : i32
    %c0_i32_0 = arith.constant 0 : i32
    %c0_i32_1 = arith.constant 0 : i32
    return %c0_i32, %c0_i32_0 : i32, i32
  }
  func.func @transform_9(%arg0: i32) -> (i32, i32, i32) {
    %c0_i32 = arith.constant 0 : i32
    %c0_i32_0 = arith.constant 0 : i32
    %c0_i32_1 = arith.constant 0 : i32
    return %arg0, %c0_i32, %c0_i32_0 : i32, i32, i32
  }
}

</mosaic_0001>

<llo_original>
// kernel: tpu_custom_call.1
$region0: #{tpu_custom_call.1}
  #allocation0 [shape = 'u32[]', space=smem, size = 0x4, offset = 0x4, fixed_abs, tag = 'smem constant byte address 0x4 - core index']
  #allocation1 [shape = 'u32[144,128]{1,0:T(1,128)}', space=vmem, size = 0x12000, scoped, tag = 'internal scratch']
  %s0 = inlined_call_operand.hbm [shape: f32[2,8,32], index: 0, kind: input, shape index: {}]
  %s1 = inlined_call_operand.hbm [shape: f32[8,32], index: 1, kind: input, shape index: {}]
  %s2 = inlined_call_operand.hbm [shape: f32[8,8], index: 2, kind: input, shape index: {}]
  %s3 = inlined_call_operand.hbm [shape: bf16[32,96], index: 3, kind: input, shape index: {}]
  %s4 = inlined_call_operand.vmem [shape: f32[1,96], index: 4, kind: input, shape index: {}]
  %s5 = inlined_call_operand.vmem [shape: bf16[32,32], index: 5, kind: input, shape index: {}]
  %s6 = inlined_call_operand.vmem [shape: f32[1,32], index: 6, kind: input, shape index: {}]
  %s7 = inlined_call_operand.vmem [shape: f32[1,32], index: 7, kind: input, shape index: {}]
  %s8 = inlined_call_operand.vmem [shape: f32[1,32], index: 8, kind: input, shape index: {}]
  %s9 = inlined_call_operand.hbm [shape: f32[2,1,256], index: 9, kind: output, shape index: {}]
  %s10 = sld [smem:[#allocation0]]
  $region85: #{tpu_custom_call.1} parent=0
    _
  %s12 = ssub.s32 1, %s10
  %s13 = scalar_select 0, %s12, %s10
  $region1: #{tpu_custom_call.1} parent=0
    #allocation2 [shape = 'u8[8192]{0}', space=vmem, size = 0x2000, scoped, tag = 'input window, operand 0']
    #allocation3 [shape = 's32[2]{0}', space=sflag, size = 0x8, scoped, tag = 'scoped memory for tpu_custom_call.1']
    #allocation4 [shape = 's32[2]{0}', space=sflag, size = 0x8, scoped, tag = 'scoped memory for tpu_custom_call.1']
    #allocation5 [shape = 'u8[4096]{0}', space=vmem, size = 0x1000, scoped, tag = 'input window, operand 1, single buffered']
    #allocation6 [shape = 's32[1]{0}', space=sflag, size = 0x4, scoped, tag = 'scoped memory for tpu_custom_call.1']
    #allocation7 [shape = 'u8[4096]{0}', space=vmem, size = 0x1000, scoped, tag = 'input window, operand 2, single buffered']
    #allocation8 [shape = 'u8[8192]{0}', space=vmem, size = 0x2000, scoped, tag = 'input window, operand 3, single buffered']
    #allocation9 [shape = 's32[1]{0}', space=sflag, size = 0x4, scoped, tag = 'scoped memory for tpu_custom_call.1']
    #allocation10 [shape = 'u8[2048]{0}', space=vmem, size = 0x800, scoped, tag = 'output window, operand 0']
    %14 = vsyncpa [#allocation3], 0
    %s15 = scalar_lea.sflag [#allocation3], 1
    %16 = vsyncpa %s15, 0
    %17 = vsyncpa [#allocation6], 0
    %18 = vsyncpa [#allocation9], 0
    %19 = vsyncpa [#allocation4], 0
    %s20 = scalar_lea.sflag [#allocation4], 1
    %21 = vsyncpa %s20, 0
    loop: start=0, step=1, limit=4
    $region2: #{tpu_custom_call.1} parent=1 // loop_pre_header
      _
    $region3: #{tpu_custom_call.1} parent=1 // loop_header
      %s23 = sphi 0, %s27
      %p24 = scmp.ge.s32.totalorder %s23, 4
      %s33 = sphi 0, %s35
      %s36 = sphi 0, %s33
      %s37 = sphi 0, %s36
      %s53 = sphi 0, %s37
      %s57 = sphi 0, %s57
      %s59 = sphi 0, %s57
      %s60 = sphi 0, %s59
      %s74 = sphi 0, %s60
      %s78 = sphi 0, %s78
      %s80 = sphi 0, %s78
      %s81 = sphi 0, %s80
      %s95 = sphi 0, %s81
      %s99 = sphi 0, %s99
      %s101 = sphi 0, %s99
      %s102 = sphi 0, %s101
      %s116 = sphi 0, %s102
      %s120 = sphi 0, %s120
      %s122 = sphi 0, %s120
      %s123 = sphi 0, %s122
      %s137 = sphi 0, %s123
      %s141 = sphi 0, %s141
      %s143 = sphi 0, %s141
      %s144 = sphi 0, %s143
      %s158 = sphi 0, %s144
      %s162 = sphi 0, %s162
      %s164 = sphi 0, %s162
      %s165 = sphi 0, %s164
      %s179 = sphi 0, %s165
      %s183 = sphi 0, %s183
      %s185 = sphi 0, %s183
      %s186 = sphi 0, %s185
      %s200 = sphi 0, %s186
      %s204 = sphi 0, %s204
      %s206 = sphi 0, %s204
      %s207 = sphi 0, %s206
      %s221 = sphi 0, %s207
      %s227 = sphi 0, %s229
      %s230 = sphi 0, %s227
      %s231 = sphi 0, %s230
      %s247 = sphi 0, %s231
    $region4: #{tpu_custom_call.1} parent=1 // loop_header_branch
      %26 = sbr.rel (%p24) target = $region8
    $region5: #{tpu_custom_call.1} parent=1 // loop_body
      %s28 = ssub.s32 %s23, 1
      %s29 = ssub.s32 %s23, 2
      %s30 = sadd.s32 %s23, 1
      %s31 = ssub.s32 %s23, %s30
      %p32 = scmp.eq.s32.totalorder %s31, 0
      %s34 = sadd.s32 %s33, 1
      %s35 = scalar_select %p32, %s33, %s34
      %p38 = pneg %p32
      %p39 = scmp.eq.s32.totalorder %s23, 1
      %p40 = por %p38, %p39
      %p41 = scmp.ne.s32.totalorder %s33, %s36
      %p42 = scmp.eq.s32.totalorder %s23, 0
      %p43 = por %p41, %p42
      %p44 = scmp.ne.s32.totalorder %s33, %s36
      %p45 = scmp.eq.s32.totalorder %s28, 1
      %p46 = por %p44, %p45
      %p47 = scmp.ne.s32.totalorder %s36, %s37
      %p48 = scmp.eq.s32.totalorder %s28, 0
      %p49 = por %p47, %p48
      %p50 = scmp.ne.s32.totalorder %s36, %s37
      %p51 = scmp.eq.s32.totalorder %s29, 1
      %p52 = por %p50, %p51
      %p54 = scmp.ne.s32.totalorder %s37, %s53
      %p55 = scmp.eq.s32.totalorder %s29, 0
      %p56 = por %p54, %p55
      %s58 = sadd.s32 %s57, 1
      %p61 = scmp.eq.s32.totalorder %s23, 1
      %p62 = scmp.ne.s32.totalorder %s57, %s59
      %p63 = scmp.eq.s32.totalorder %s23, 0
      %p64 = por %p62, %p63
      %p65 = scmp.ne.s32.totalorder %s57, %s59
      %p66 = scmp.eq.s32.totalorder %s28, 1
      %p67 = por %p65, %p66
      %p68 = scmp.ne.s32.totalorder %s59, %s60
      %p69 = scmp.eq.s32.totalorder %s28, 0
      %p70 = por %p68, %p69
      %p71 = scmp.ne.s32.totalorder %s59, %s60
      %p72 = scmp.eq.s32.totalorder %s29, 1
      %p73 = por %p71, %p72
      %p75 = scmp.ne.s32.totalorder %s60, %s74
      %p76 = scmp.eq.s32.totalorder %s29, 0
      %p77 = por %p75, %p76
      %s79 = sadd.s32 %s78, 1
      %p82 = scmp.eq.s32.totalorder %s23, 1
      %p83 = scmp.ne.s32.totalorder %s78, %s80
      %p84 = scmp.eq.s32.totalorder %s23, 0
      %p85 = por %p83, %p84
      %p86 = scmp.ne.s32.totalorder %s78, %s80
      %p87 = scmp.eq.s32.totalorder %s28, 1
      %p88 = por %p86, %p87
      %p89 = scmp.ne.s32.totalorder %s80, %s81
      %p90 = scmp.eq.s32.totalorder %s28, 0
      %p91 = por %p89, %p90
      %p92 = scmp.ne.s32.totalorder %s80, %s81
      %p93 = scmp.eq.s32.totalorder %s29, 1
      %p94 = por %p92, %p93
      %p96 = scmp.ne.s32.totalorder %s81, %s95
      %p97 = scmp.eq.s32.totalorder %s29, 0
      %p98 = por %p96, %p97
      %s100 = sadd.s32 %s99, 1
      %p103 = scmp.eq.s32.totalorder %s23, 1
      %p104 = scmp.ne.s32.totalorder %s99, %s101
      %p105 = scmp.eq.s32.totalorder %s23, 0
      %p106 = por %p104, %p105
      %p107 = scmp.ne.s32.totalorder %s99, %s101
      %p108 = scmp.eq.s32.totalorder %s28, 1
      %p109 = por %p107, %p108
      %p110 = scmp.ne.s32.totalorder %s101, %s102
      %p111 = scmp.eq.s32.totalorder %s28, 0
      %p112 = por %p110, %p111
      %p113 = scmp.ne.s32.totalorder %s101, %s102
      %p114 = scmp.eq.s32.totalorder %s29, 1
      %p115 = por %p113, %p114
      %p117 = scmp.ne.s32.totalorder %s102, %s116
      %p118 = scmp.eq.s32.totalorder %s29, 0
      %p119 = por %p117, %p118
      %s121 = sadd.s32 %s120, 1
      %p124 = scmp.eq.s32.totalorder %s23, 1
      %p125 = scmp.ne.s32.totalorder %s120, %s122
      %p126 = scmp.eq.s32.totalorder %s23, 0
      %p127 = por %p125, %p126
      %p128 = scmp.ne.s32.totalorder %s120, %s122
      %p129 = scmp.eq.s32.totalorder %s28, 1
      %p130 = por %p128, %p129
      %p131 = scmp.ne.s32.totalorder %s122, %s123
      %p132 = scmp.eq.s32.totalorder %s28, 0
      %p133 = por %p131, %p132
      %p134 = scmp.ne.s32.totalorder %s122, %s123
      %p135 = scmp.eq.s32.totalorder %s29, 1
      %p136 = por %p134, %p135
      %p138 = scmp.ne.s32.totalorder %s123, %s137
      %p139 = scmp.eq.s32.totalorder %s29, 0
      %p140 = por %p138, %p139
      %s142 = sadd.s32 %s141, 1
      %p145 = scmp.eq.s32.totalorder %s23, 1
      %p146 = scmp.ne.s32.totalorder %s141, %s143
      %p147 = scmp.eq.s32.totalorder %s23, 0
      %p148 = por %p146, %p147
      %p149 = scmp.ne.s32.totalorder %s141, %s143
      %p150 = scmp.eq.s32.totalorder %s28, 1
      %p151 = por %p149, %p150
      %p152 = scmp.ne.s32.totalorder %s143, %s144
      %p153 = scmp.eq.s32.totalorder %s28, 0
      %p154 = por %p152, %p153
      %p155 = scmp.ne.s32.totalorder %s143, %s144
      %p156 = scmp.eq.s32.totalorder %s29, 1
      %p157 = por %p155, %p156
      %p159 = scmp.ne.s32.totalorder %s144, %s158
      %p160 = scmp.eq.s32.totalorder %s29, 0
      %p161 = por %p159, %p160
      %s163 = sadd.s32 %s162, 1
      %p166 = scmp.eq.s32.totalorder %s23, 1
      %p167 = scmp.ne.s32.totalorder %s162, %s164
      %p168 = scmp.eq.s32.totalorder %s23, 0
      %p169 = por %p167, %p168
      %p170 = scmp.ne.s32.totalorder %s162, %s164
      %p171 = scmp.eq.s32.totalorder %s28, 1
      %p172 = por %p170, %p171
      %p173 = scmp.ne.s32.totalorder %s164, %s165
      %p174 = scmp.eq.s32.totalorder %s28, 0
      %p175 = por %p173, %p174
      %p176 = scmp.ne.s32.totalorder %s164, %s165
      %p177 = scmp.eq.s32.totalorder %s29, 1
      %p178 = por %p176, %p177
      %p180 = scmp.ne.s32.totalorder %s165, %s179
      %p181 = scmp.eq.s32.totalorder %s29, 0
      %p182 = por %p180, %p181
      %s184 = sadd.s32 %s183, 1
      %p187 = scmp.eq.s32.totalorder %s23, 1
      %p188 = scmp.ne.s32.totalorder %s183, %s185
      %p189 = scmp.eq.s32.totalorder %s23, 0
      %p190 = por %p188, %p189
      %p191 = scmp.ne.s32.totalorder %s183, %s185
      %p192 = scmp.eq.s32.totalorder %s28, 1
      %p193 = por %p191, %p192
      %p194 = scmp.ne.s32.totalorder %s185, %s186
      %p195 = scmp.eq.s32.totalorder %s28, 0
      %p196 = por %p194, %p195
      %p197 = scmp.ne.s32.totalorder %s185, %s186
      %p198 = scmp.eq.s32.totalorder %s29, 1
      %p199 = por %p197, %p198
      %p201 = scmp.ne.s32.totalorder %s186, %s200
      %p202 = scmp.eq.s32.totalorder %s29, 0
      %p203 = por %p201, %p202
      %s205 = sadd.s32 %s204, 1
      %p208 = scmp.eq.s32.totalorder %s23, 1
      %p209 = scmp.ne.s32.totalorder %s204, %s206
      %p210 = scmp.eq.s32.totalorder %s23, 0
      %p211 = por %p209, %p210
      %p212 = scmp.ne.s32.totalorder %s204, %s206
      %p213 = scmp.eq.s32.totalorder %s28, 1
      %p214 = por %p212, %p213
      %p215 = scmp.ne.s32.totalorder %s206, %s207
      %p216 = scmp.eq.s32.totalorder %s28, 0
      %p217 = por %p215, %p216
      %p218 = scmp.ne.s32.totalorder %s206, %s207
      %p219 = scmp.eq.s32.totalorder %s29, 1
      %p220 = por %p218, %p219
      %p222 = scmp.ne.s32.totalorder %s207, %s221
      %p223 = scmp.eq.s32.totalorder %s29, 0
      %p224 = por %p222, %p223
      %s225 = ssub.s32 %s23, %s30
      %p226 = scmp.eq.s32.totalorder %s225, 0
      %s228 = sadd.s32 %s227, 1
      %s229 = scalar_select %p226, %s227, %s228
      %p232 = pneg %p226
      %p233 = scmp.eq.s32.totalorder %s23, 1
      %p234 = por %p232, %p233
      %p235 = scmp.ne.s32.totalorder %s227, %s230
      %p236 = scmp.eq.s32.totalorder %s23, 0
      %p237 = por %p235, %p236
      %p238 = scmp.ne.s32.totalorder %s227, %s230
      %p239 = scmp.eq.s32.totalorder %s28, 1
      %p240 = por %p238, %p239
      %p241 = scmp.ne.s32.totalorder %s230, %s231
      %p242 = scmp.eq.s32.totalorder %s28, 0
      %p243 = por %p241, %p242
      %p244 = scmp.ne.s32.totalorder %s230, %s231
      %p245 = scmp.eq.s32.totalorder %s29, 1
      %p246 = por %p244, %p245
      %p248 = scmp.ne.s32.totalorder %s231, %s247
      %p249 = scmp.eq.s32.totalorder %s29, 0
      %p250 = por %p248, %p249
      %p251 = scmp.le.s32.totalorder 1, %s23
      %p252 = scmp.lt.s32.totalorder %s23, 3
      %p253 = pnand %p251, %p252
      %p254 = pneg %p253
      // Predicated region
      $region9: #{tpu_custom_call.1} parent=5 // pred_check
        _
      $region10: #{tpu_custom_call.1} parent=5 // pred_check_branch
        %256 = sbr.rel (%p253) target = $region12
      $region11: #{tpu_custom_call.1} parent=5 // pred_region
        %s257 = ssub.s32 %s23, 1
        // Predicated region
        $region13: #{tpu_custom_call.1} parent=11 // pred_check
          %p258 = pneg %p70
        $region14: #{tpu_custom_call.1} parent=11 // pred_check_branch
          %260 = sbr.rel (%p258) target = $region16
        $region15: #{tpu_custom_call.1} parent=11 // pred_region
          %s262 = ssub.s32 128, 128
          %263 = vsyncadd [#allocation6], %s262
          %s265 = sshll.u32 [#allocation5], 4
          %s266 = int_to_ptr.vmem [resolvable:$true] %s265
          %268 = dma.hbm_to_vmem [thread:$0]  %s1, 128, %s266, [#allocation6]
        $region16: #{tpu_custom_call.1} parent=11 // pred_fallthru
          _
        // Predicated region
        $region17: #{tpu_custom_call.1} parent=11 // pred_check
          %p269 = pneg %p91
        $region18: #{tpu_custom_call.1} parent=11 // pred_check_branch
          %271 = sbr.rel (%p269) target = $region20
        $region19: #{tpu_custom_call.1} parent=11 // pred_region
          %s273 = ssub.s32 128, 128
          %274 = vsyncadd [#allocation6], %s273
          %s276 = sshll.u32 [#allocation7], 4
          %s277 = int_to_ptr.vmem [resolvable:$true] %s276
          %279 = dma.hbm_to_vmem [thread:$0]  %s2, 128, %s277, [#allocation6]
        $region20: #{tpu_custom_call.1} parent=11 // pred_fallthru
          _
        // Predicated region
        $region21: #{tpu_custom_call.1} parent=11 // pred_check
          %p280 = pneg %p112
        $region22: #{tpu_custom_call.1} parent=11 // pred_check_branch
          %282 = sbr.rel (%p280) target = $region24
        $region23: #{tpu_custom_call.1} parent=11 // pred_region
          %s284 = ssub.s32 256, 256
          %285 = vsyncadd [#allocation9], %s284
          %s286 = sshll.u32 [#allocation8], 4
          %s287 = int_to_ptr.vmem [resolvable:$true] %s286
          %292 = dma.hbm_to_vmem [thread:$0]  %s3, 256, %s287, [#allocation9], 64, 64, 4
        $region24: #{tpu_custom_call.1} parent=11 // pred_fallthru
          _
        // Predicated region
        $region25: #{tpu_custom_call.1} parent=11 // pred_check
          %p293 = pneg %p133
        $region26: #{tpu_custom_call.1} parent=11 // pred_check_branch
          %295 = sbr.rel (%p293) target = $region28
        $region27: #{tpu_custom_call.1} parent=11 // pred_region
          _
        $region28: #{tpu_custom_call.1} parent=11 // pred_fallthru
          _
        // Predicated region
        $region29: #{tpu_custom_call.1} parent=11 // pred_check
          %p296 = pneg %p154
        $region30: #{tpu_custom_call.1} parent=11 // pred_check_branch
          %298 = sbr.rel (%p296) target = $region32
        $region31: #{tpu_custom_call.1} parent=11 // pred_region
          _
        $region32: #{tpu_custom_call.1} parent=11 // pred_fallthru
          _
        // Predicated region
        $region33: #{tpu_custom_call.1} parent=11 // pred_check
          %p299 = pneg %p175
        $region34: #{tpu_custom_call.1} parent=11 // pred_check_branch
          %301 = sbr.rel (%p299) target = $region36
        $region35: #{tpu_custom_call.1} parent=11 // pred_region
          _
        $region36: #{tpu_custom_call.1} parent=11 // pred_fallthru
          _
        // Predicated region
        $region37: #{tpu_custom_call.1} parent=11 // pred_check
          %p302 = pneg %p196
        $region38: #{tpu_custom_call.1} parent=11 // pred_check_branch
          %304 = sbr.rel (%p302) target = $region40
        $region39: #{tpu_custom_call.1} parent=11 // pred_region
          _
        $region40: #{tpu_custom_call.1} parent=11 // pred_fallthru
          _
        // Predicated region
        $region41: #{tpu_custom_call.1} parent=11 // pred_check
          %p305 = pneg %p217
        $region42: #{tpu_custom_call.1} parent=11 // pred_check_branch
          %307 = sbr.rel (%p305) target = $region44
        $region43: #{tpu_custom_call.1} parent=11 // pred_region
          _
        $region44: #{tpu_custom_call.1} parent=11 // pred_fallthru
          _
      $region12: #{tpu_custom_call.1} parent=5 // pred_fallthru
        _
      %p308 = scmp.lt.s32.totalorder %s23, 2
      // Predicated region
      $region45: #{tpu_custom_call.1} parent=5 // pred_check
        %p309 = pneg %p308
      $region46: #{tpu_custom_call.1} parent=5 // pred_check_branch
        %311 = sbr.rel (%p309) target = $region48
      $region47: #{tpu_custom_call.1} parent=5 // pred_region
        // Predicated region
        $region49: #{tpu_custom_call.1} parent=47 // pred_check
          %p312 = pneg %p43
        $region50: #{tpu_custom_call.1} parent=47 // pred_check_branch
          %314 = sbr.rel (%p312) target = $region52
        $region51: #{tpu_custom_call.1} parent=47 // pred_region
          %s315 = sand.u32 %s33, 1
          %s316 = scalar_lea.sflag [#allocation3], %s315
          %s317 = sand.u32 %s33, 1
          %s318 = smul.addr %s317, 8
          %s319 = scalar_lea.vmem [#allocation2], %s318
          %s321 = ssub.s32 128, 128
          %322 = vsyncadd %s316, %s321
          %s323 = smul.addr %s23, 128
          %s324 = scalar_lea.hbm %s0, %s323
          %s326 = sshll.u32 %s319, 4
          %s327 = int_to_ptr.vmem [resolvable:$true] %s326
          %329 = dma.hbm_to_vmem [thread:$0]  %s324, 128, %s327, %s316
        $region52: #{tpu_custom_call.1} parent=47 // pred_fallthru
          _
      $region48: #{tpu_custom_call.1} parent=5 // pred_fallthru
        _
      %p330 = scmp.le.s32.totalorder 1, %s23
      %p331 = scmp.lt.s32.totalorder %s23, 3
      %p332 = pnand %p330, %p331
      %p333 = pneg %p332
      // Predicated region
      $region53: #{tpu_custom_call.1} parent=5 // pred_check
        _
      $region54: #{tpu_custom_call.1} parent=5 // pred_check_branch
        %335 = sbr.rel (%p332) target = $region56
      $region55: #{tpu_custom_call.1} parent=5 // pred_region
        %s336 = ssub.s32 %s23, 1
        %s337 = sand.u32 %s36, 1
        %s338 = scalar_lea.sflag [#allocation3], %s337
        %s339 = sand.u32 %s36, 1
        %s340 = smul.addr %s339, 8
        %s341 = scalar_lea.vmem [#allocation2], %s340
        // Predicated region
        $region57: #{tpu_custom_call.1} parent=55 // pred_check
          %p342 = pneg %p49
        $region58: #{tpu_custom_call.1} parent=55 // pred_check_branch
          %344 = sbr.rel (%p342) target = $region60
        $region59: #{tpu_custom_call.1} parent=55 // pred_region
          %345 = dma.done %s338, 128
        $region60: #{tpu_custom_call.1} parent=55 // pred_fallthru
          _
        // Predicated region
        $region61: #{tpu_custom_call.1} parent=55 // pred_check
          %p346 = pneg %p70
        $region62: #{tpu_custom_call.1} parent=55 // pred_check_branch
          %348 = sbr.rel (%p346) target = $region64
        $region63: #{tpu_custom_call.1} parent=55 // pred_region
          %349 = dma.done [#allocation6], 128
        $region64: #{tpu_custom_call.1} parent=55 // pred_fallthru
          _
        // Predicated region
        $region65: #{tpu_custom_call.1} parent=55 // pred_check
          %p350 = pneg %p91
        $region66: #{tpu_custom_call.1} parent=55 // pred_check_branch
          %352 = sbr.rel (%p350) target = $region68
        $region67: #{tpu_custom_call.1} parent=55 // pred_region
          %353 = dma.done [#allocation6], 128
        $region68: #{tpu_custom_call.1} parent=55 // pred_fallthru
          _
        // Predicated region
        $region69: #{tpu_custom_call.1} parent=55 // pred_check
          %p354 = pneg %p112
        $region70: #{tpu_custom_call.1} parent=55 // pred_check_branch
          %356 = sbr.rel (%p354) target = $region72
        $region71: #{tpu_custom_call.1} parent=55 // pred_region
          %357 = dma.done [#allocation9], 256
        $region72: #{tpu_custom_call.1} parent=55 // pred_fallthru
          _
        %s358 = sand.u32 %s36, 1
        %s359 = scalar_lea.sflag [#allocation3], %s358
        %s360 = sand.u32 %s36, 1
        %s361 = smul.addr %s360, 8
        %s362 = scalar_lea.vmem [#allocation2], %s361
        %p363 = pneg %p49
        %p364 = pneg %p46
        %p365 = pneg %p70
        %p366 = pneg %p67
        %p367 = pneg %p91
        %p368 = pneg %p88
        %p369 = pneg %p112
        %p370 = pneg %p109
        %p371 = pneg %p133
        %p372 = pneg %p130
        %p373 = pneg %p154
        %p374 = pneg %p151
        %p375 = pneg %p175
        %p376 = pneg %p172
        %p377 = pneg %p196
        %p378 = pneg %p193
        %p379 = pneg %p217
        %p380 = pneg %p214
        %p381 = pneg %p243
        %p382 = pneg %p240
        %s383 = sand.u32 %s230, 1
        %s384 = scalar_lea.sflag [#allocation4], %s383
        %s385 = sand.u32 %s230, 1
        %s386 = smul.addr %s385, 2
        %s387 = scalar_lea.vmem [#allocation10], %s386
        %v389 = vld [vmem:[%s341] sm:$0xff]
        %v390 = vld [vmem:[#allocation5] sm:$0xff]
        %v391 = vadd.f32 %v389, %v390
        %v392 = vpack.c.bf16 %v391, %v391
        %v393 = vld [vmem:[#allocation8] sm:$0xf]
        %v394 = vld [vmem:[#allocation8 + $0x4] sm:$0xf]
        %v395 = vld [vmem:[#allocation8 + $0x8] sm:$0xf]
        %v396 = vld [vmem:[#allocation8 + $0xc] sm:$0xf]
        %v397 = vld [vmem:[%s4] sm:$0x1]
        %v399 = vlaneseq
        %v400 = vshrl.u32 %v399, 7
        %v401 = vsub.s32 0, %v400
        %v402 = vrot.slane %v397, %v401
        %v408 = vunpack.c.l.b16 %v393
        %v409 = vunpack.c.l.b16 %v394
        %v410 = vunpack.c.l.b16 %v395
        %v411 = vunpack.c.l.b16 %v396
        %v412 = vpack.c.b16 %v409, %v408
        %v413 = vpack.c.b16 %v411, %v410
        %vm416 = vcmask 261120
        %v418 = vsel %vm416, %v392, 0
        %420 = vmatprep.subr.bf16.mxu0 0
        %421 = vmatpush1.bf16.msra.mxu0 %v412
        %422 = vmatprep.subr.bf16.mxu0 0
        %423 = vmatpush1.bf16.msra.mxu0 %v413
        %424 = vmatprep.subr.bf16.mxu0 0
        %425 = vmatpush1.bf16.msra.mxu0 0
        %426 = vmatprep.subr.bf16.mxu0 0
        %427 = vmatpush1.bf16.msra.mxu0 0
        %428 = vmatprep.subr.bf16.mxu0 0
        %429 = vmatpush1.bf16.msra.mxu0 0
        %430 = vmatprep.subr.bf16.mxu0 0
        %431 = vmatpush1.bf16.msra.mxu0 0
        %432 = vmatprep.subr.bf16.mxu0 0
        %433 = vmatpush1.bf16.msra.mxu0 0
        %434 = vmatprep.subr.bf16.mxu0 0
        %435 = vmatpush1.bf16.msra.mxu0 0
        %436 = vmatprep.subr.bf16.mxu0 0
        %437 = vmatpush1.bf16.msra.mxu0 0
        %438 = vmatprep.subr.bf16.mxu0 0
        %439 = vmatpush1.bf16.msra.mxu0 0
        %440 = vmatprep.subr.bf16.mxu0 0
        %441 = vmatpush1.bf16.msra.mxu0 0
        %442 = vmatprep.subr.bf16.mxu0 0
        %443 = vmatpush1.bf16.msra.mxu0 0
        %444 = vmatprep.subr.bf16.mxu0 0
        %445 = vmatpush1.bf16.msra.mxu0 0
        %446 = vmatprep.subr.bf16.mxu0 0
        %447 = vmatpush1.bf16.msra.mxu0 0
        %448 = vmatprep.subr.bf16.mxu0 0
        %449 = vmatpush1.bf16.msra.mxu0 0
        %450 = vmatprep.subr.bf16.mxu0 0
        %451 = vmatpush1.bf16.msra.mxu0 0
        %452 = vmatprep.mubr.bf16.mxu0 0
        %453 = vmatmul.mubr.bf16.gmra.mrb[0].mxu0 %v418
        %v454 = vpop.f32.mrb[0].mxu0
        %v455 = vadd.f32 %v402, %v454
        %v456 = vpop.f32.mrb[0].mxu0
        %v457 = vpop.f32.mrb[0].mxu0
        %v458 = vpop.f32.mrb[0].mxu0
        %459 = vdwg.mxu0
        %v460 = vpack.c.bf16 %v455, %v455
        %v461 = vmax.f32 %v455, 0.0
        %v462 = vpack.c.bf16 %v461, %v461
        %464 = vrot.lane.b32.xlu0 %v460, 112
        %v465 = vpop.permute.xlu0 %464
        %467 = vrot.lane.b32.xlu0 %v462, 112
        %v468 = vpop.permute.xlu0 %467
        %v469 = vld [vmem:[#allocation7] sm:$0xff]
        %470 = vrot.lane.b32.xlu0 %v460, 96
        %v471 = vpop.permute.xlu0 %470
        %vm472 = vcmask 130048
        %v474 = vsel %vm472, %v460, 0
        %v477 = vsel %vm472, %v471, 0
        %479 = vmatprep.subr.bf16.mxu0 0
        %480 = vmatpush1.bf16.xpose.msra.mxu0 %v477
        %481 = vmatprep.subr.bf16.mxu0 0
        %482 = vmatpush1.bf16.xpose.msra.mxu0 0
        %483 = vmatprep.subr.bf16.mxu0 0
        %484 = vmatpush1.bf16.xpose.msra.mxu0 0
        %485 = vmatprep.subr.bf16.mxu0 0
        %486 = vmatpush1.bf16.xpose.msra.mxu0 0
        %487 = vmatprep.subr.bf16.mxu0 0
        %488 = vmatpush1.bf16.xpose.msra.mxu0 0
        %489 = vmatprep.subr.bf16.mxu0 0
        %490 = vmatpush1.bf16.xpose.msra.mxu0 0
        %491 = vmatprep.subr.bf16.mxu0 0
        %492 = vmatpush1.bf16.xpose.msra.mxu0 0
        %493 = vmatprep.subr.bf16.mxu0 0
        %494 = vmatpush1.bf16.xpose.msra.mxu0 0
        %495 = vmatprep.subr.bf16.mxu0 0
        %496 = vmatpush1.bf16.xpose.msra.mxu0 0
        %497 = vmatprep.subr.bf16.mxu0 0
        %498 = vmatpush1.bf16.xpose.msra.mxu0 0
        %499 = vmatprep.subr.bf16.mxu0 0
        %500 = vmatpush1.bf16.xpose.msra.mxu0 0
        %501 = vmatprep.subr.bf16.mxu0 0
        %502 = vmatpush1.bf16.xpose.msra.mxu0 0
        %503 = vmatprep.subr.bf16.mxu0 0
        %504 = vmatpush1.bf16.xpose.msra.mxu0 0
        %505 = vmatprep.subr.bf16.mxu0 0
        %506 = vmatpush1.bf16.xpose.msra.mxu0 0
        %507 = vmatprep.subr.bf16.mxu0 0
        %508 = vmatpush1.bf16.xpose.msra.mxu0 0
        %509 = vmatprep.subr.bf16.mxu0 0
        %510 = vmatpush1.bf16.xpose.msra.mxu0 0
        %511 = vmatprep.mubr.bf16.mxu0 0
        %512 = vmatmul.mubr.bf16.gmra.mrb[0].mxu0 %v474
        %v513 = vpop.f32.mrb[0].mxu0
        %v514 = vadd.f32 %v469, %v513
        %v515 = vpop.f32.mrb[0].mxu0
        %v516 = vpop.f32.mrb[0].mxu0
        %v517 = vpop.f32.mrb[0].mxu0
        %518 = vdwg.mxu0
        %519 = vrot.lane.b32.xlu0 %v465, 96
        %v520 = vpop.permute.xlu0 %519
        %v522 = vsel %vm472, %v465, 0
        %v525 = vsel %vm472, %v520, 0
        %527 = vmatprep.subr.bf16.mxu0 0
        %528 = vmatpush1.bf16.xpose.msra.mxu0 %v525
        %529 = vmatprep.subr.bf16.mxu0 0
        %530 = vmatpush1.bf16.xpose.msra.mxu0 0
        %531 = vmatprep.subr.bf16.mxu0 0
        %532 = vmatpush1.bf16.xpose.msra.mxu0 0
        %533 = vmatprep.subr.bf16.mxu0 0
        %534 = vmatpush1.bf16.xpose.msra.mxu0 0
        %535 = vmatprep.subr.bf16.mxu0 0
        %536 = vmatpush1.bf16.xpose.msra.mxu0 0
        %537 = vmatprep.subr.bf16.mxu0 0
        %538 = vmatpush1.bf16.xpose.msra.mxu0 0
        %539 = vmatprep.subr.bf16.mxu0 0
        %540 = vmatpush1.bf16.xpose.msra.mxu0 0
        %541 = vmatprep.subr.bf16.mxu0 0
        %542 = vmatpush1.bf16.xpose.msra.mxu0 0
        %543 = vmatprep.subr.bf16.mxu0 0
        %544 = vmatpush1.bf16.xpose.msra.mxu0 0
        %545 = vmatprep.subr.bf16.mxu0 0
        %546 = vmatpush1.bf16.xpose.msra.mxu0 0
        %547 = vmatprep.subr.bf16.mxu0 0
        %548 = vmatpush1.bf16.xpose.msra.mxu0 0
        %549 = vmatprep.subr.bf16.mxu0 0
        %550 = vmatpush1.bf16.xpose.msra.mxu0 0
        %551 = vmatprep.subr.bf16.mxu0 0
        %552 = vmatpush1.bf16.xpose.msra.mxu0 0
        %553 = vmatprep.subr.bf16.mxu0 0
        %554 = vmatpush1.bf16.xpose.msra.mxu0 0
        %555 = vmatprep.subr.bf16.mxu0 0
        %556 = vmatpush1.bf16.xpose.msra.mxu0 0
        %557 = vmatprep.subr.bf16.mxu0 0
        %558 = vmatpush1.bf16.xpose.msra.mxu0 0
        %559 = vmatprep.mubr.bf16.mxu0 0
        %560 = vmatmul.mubr.bf16.gmra.mrb[0].mxu0 %v522
        %v561 = vpop.f32.mrb[0].mxu0
        %v562 = vadd.f32 %v469, %v561
        %v563 = vpop.f32.mrb[0].mxu0
        %v564 = vpop.f32.mrb[0].mxu0
        %v565 = vpop.f32.mrb[0].mxu0
        %566 = vdwg.mxu0
        %vm567 = vcmask 64512
        %v568 = vsel %vm567, %v514, -inf
        %569 = vmax.xlane.f32.xlu0 %v568
        %v570 = vpop.xlane.xlu0 %569
        %v571 = vsel %vm567, %v562, -inf
        %572 = vmax.xlane.f32.xlu0 %v571
        %v573 = vpop.xlane.xlu0 %572
        %v574 = vsub.f32 %v514, %v570
        %v575 = vsub.f32 %v562, %v573
        %v576 = vmul.f32 %v574, 1.442695
        %v577 = vpow.pop %v576
        %v578 = vmul.f32 %v575, 1.442695
        %v579 = vpow.pop %v578
        %v580 = vsel %vm567, %v577, 0.0
        %581 = vadd.xlane.f32.xlu0 %v580
        %v582 = vpop.xlane.xlu0 %581
        %v583 = vsel %vm567, %v579, 0.0
        %584 = vadd.xlane.f32.xlu0 %v583
        %v585 = vpop.xlane.xlu0 %584
        %v586 = vrcp.pop %v582
        %v587 = vrcp.pop %v585
        %v588 = vmul.f32 %v577, %v586
        %v589 = vmul.f32 %v579, %v587
        %v590 = vpack.c.bf16 %v588, %v588
        %v591 = vpack.c.bf16 %v589, %v589
        %592 = vrot.lane.b32.xlu0 %v462, 64
        %v593 = vpop.permute.xlu0 %592
        %v595 = vsel %vm567, %v590, 0
        %vm597 = vcmask 1043456
        %v599 = vsel %vm597, %v593, 0
        %601 = vmatprep.subr.bf16.mxu0 0
        %602 = vmatpush1.bf16.msra.mxu0 %v599
        %603 = vmatprep.subr.bf16.mxu0 0
        %604 = vmatpush1.bf16.msra.mxu0 0
        %605 = vmatprep.subr.bf16.mxu0 0
        %606 = vmatpush1.bf16.msra.mxu0 0
        %607 = vmatprep.subr.bf16.mxu0 0
        %608 = vmatpush1.bf16.msra.mxu0 0
        %609 = vmatprep.subr.bf16.mxu0 0
        %610 = vmatpush1.bf16.msra.mxu0 0
        %611 = vmatprep.subr.bf16.mxu0 0
        %612 = vmatpush1.bf16.msra.mxu0 0
        %613 = vmatprep.subr.bf16.mxu0 0
        %614 = vmatpush1.bf16.msra.mxu0 0
        %615 = vmatprep.subr.bf16.mxu0 0
        %616 = vmatpush1.bf16.msra.mxu0 0
        %617 = vmatprep.subr.bf16.mxu0 0
        %618 = vmatpush1.bf16.msra.mxu0 0
        %619 = vmatprep.subr.bf16.mxu0 0
        %620 = vmatpush1.bf16.msra.mxu0 0
        %621 = vmatprep.subr.bf16.mxu0 0
        %622 = vmatpush1.bf16.msra.mxu0 0
        %623 = vmatprep.subr.bf16.mxu0 0
        %624 = vmatpush1.bf16.msra.mxu0 0
        %625 = vmatprep.subr.bf16.mxu0 0
        %626 = vmatpush1.bf16.msra.mxu0 0
        %627 = vmatprep.subr.bf16.mxu0 0
        %628 = vmatpush1.bf16.msra.mxu0 0
        %629 = vmatprep.subr.bf16.mxu0 0
        %630 = vmatpush1.bf16.msra.mxu0 0
        %631 = vmatprep.subr.bf16.mxu0 0
        %632 = vmatpush1.bf16.msra.mxu0 0
        %633 = vmatprep.mubr.bf16.mxu0 0
        %634 = vmatmul.mubr.bf16.gmra.mrb[0].mxu0 %v595
        %v635 = vpop.f32.mrb[0].mxu0
        %v636 = vadd.f32 0.0, %v635
        %v637 = vpop.f32.mrb[0].mxu0
        %v638 = vpop.f32.mrb[0].mxu0
        %v639 = vpop.f32.mrb[0].mxu0
        %640 = vdwg.mxu0
        %641 = vrot.lane.b32.xlu0 %v468, 64
        %v642 = vpop.permute.xlu0 %641
        %v644 = vsel %vm567, %v591, 0
        %v647 = vsel %vm597, %v642, 0
        %649 = vmatprep.subr.bf16.mxu0 0
        %650 = vmatpush1.bf16.msra.mxu0 %v647
        %651 = vmatprep.subr.bf16.mxu0 0
        %652 = vmatpush1.bf16.msra.mxu0 0
        %653 = vmatprep.subr.bf16.mxu0 0
        %654 = vmatpush1.bf16.msra.mxu0 0
        %655 = vmatprep.subr.bf16.mxu0 0
        %656 = vmatpush1.bf16.msra.mxu0 0
        %657 = vmatprep.subr.bf16.mxu0 0
        %658 = vmatpush1.bf16.msra.mxu0 0
        %659 = vmatprep.subr.bf16.mxu0 0
        %660 = vmatpush1.bf16.msra.mxu0 0
        %661 = vmatprep.subr.bf16.mxu0 0
        %662 = vmatpush1.bf16.msra.mxu0 0
        %663 = vmatprep.subr.bf16.mxu0 0
        %664 = vmatpush1.bf16.msra.mxu0 0
        %665 = vmatprep.subr.bf16.mxu0 0
        %666 = vmatpush1.bf16.msra.mxu0 0
        %667 = vmatprep.subr.bf16.mxu0 0
        %668 = vmatpush1.bf16.msra.mxu0 0
        %669 = vmatprep.subr.bf16.mxu0 0
        %670 = vmatpush1.bf16.msra.mxu0 0
        %671 = vmatprep.subr.bf16.mxu0 0
        %672 = vmatpush1.bf16.msra.mxu0 0
        %673 = vmatprep.subr.bf16.mxu0 0
        %674 = vmatpush1.bf16.msra.mxu0 0
        %675 = vmatprep.subr.bf16.mxu0 0
        %676 = vmatpush1.bf16.msra.mxu0 0
        %677 = vmatprep.subr.bf16.mxu0 0
        %678 = vmatpush1.bf16.msra.mxu0 0
        %679 = vmatprep.subr.bf16.mxu0 0
        %680 = vmatpush1.bf16.msra.mxu0 0
        %681 = vmatprep.mubr.bf16.mxu0 0
        %682 = vmatmul.mubr.bf16.gmra.mrb[0].mxu0 %v644
        %v683 = vpop.f32.mrb[0].mxu0
        %v684 = vadd.f32 0.0, %v683
        %v685 = vpop.f32.mrb[0].mxu0
        %v686 = vpop.f32.mrb[0].mxu0
        %v687 = vpop.f32.mrb[0].mxu0
        %688 = vdwg.mxu0
        %690 = vrot.lane.b32.xlu0 %v684, 16
        %v691 = vpop.permute.xlu0 %690
        %v693 = vsel %vm472, %v636, %v691
        %v694 = vpack.c.bf16 %v693, %v693
        %v695 = vld [vmem:[%s5] sm:$0xf]
        %v696 = vld [vmem:[%s5 + $0x4] sm:$0xf]
        %v697 = vld [vmem:[%s5 + $0x8] sm:$0xf]
        %v698 = vld [vmem:[%s5 + $0xc] sm:$0xf]
        %v699 = vld [vmem:[%s6] sm:$0x1]
        %v701 = vlaneseq
        %v702 = vshrl.u32 %v701, 7
        %v703 = vsub.s32 0, %v702
        %v704 = vrot.slane %v699, %v703
        %v710 = vunpack.c.l.b16 %v695
        %v711 = vunpack.c.l.b16 %v696
        %v712 = vunpack.c.l.b16 %v697
        %v713 = vunpack.c.l.b16 %v698
        %v714 = vpack.c.b16 %v711, %v710
        %v715 = vpack.c.b16 %v713, %v712
        %v719 = vsel %vm416, %v694, 0
        %721 = vmatprep.subr.bf16.mxu0 0
        %722 = vmatpush1.bf16.msra.mxu0 %v714
        %723 = vmatprep.subr.bf16.mxu0 0
        %724 = vmatpush1.bf16.msra.mxu0 %v715
        %725 = vmatprep.subr.bf16.mxu0 0
        %726 = vmatpush1.bf16.msra.mxu0 0
        %727 = vmatprep.subr.bf16.mxu0 0
        %728 = vmatpush1.bf16.msra.mxu0 0
        %729 = vmatprep.subr.bf16.mxu0 0
        %730 = vmatpush1.bf16.msra.mxu0 0
        %731 = vmatprep.subr.bf16.mxu0 0
        %732 = vmatpush1.bf16.msra.mxu0 0
        %733 = vmatprep.subr.bf16.mxu0 0
        %734 = vmatpush1.bf16.msra.mxu0 0
        %735 = vmatprep.subr.bf16.mxu0 0
        %736 = vmatpush1.bf16.msra.mxu0 0
        %737 = vmatprep.subr.bf16.mxu0 0
        %738 = vmatpush1.bf16.msra.mxu0 0
        %739 = vmatprep.subr.bf16.mxu0 0
        %740 = vmatpush1.bf16.msra.mxu0 0
        %741 = vmatprep.subr.bf16.mxu0 0
        %742 = vmatpush1.bf16.msra.mxu0 0
        %743 = vmatprep.subr.bf16.mxu0 0
        %744 = vmatpush1.bf16.msra.mxu0 0
        %745 = vmatprep.subr.bf16.mxu0 0
        %746 = vmatpush1.bf16.msra.mxu0 0
        %747 = vmatprep.subr.bf16.mxu0 0
        %748 = vmatpush1.bf16.msra.mxu0 0
        %749 = vmatprep.subr.bf16.mxu0 0
        %750 = vmatpush1.bf16.msra.mxu0 0
        %751 = vmatprep.subr.bf16.mxu0 0
        %752 = vmatpush1.bf16.msra.mxu0 0
        %753 = vmatprep.mubr.bf16.mxu0 0
        %754 = vmatmul.mubr.bf16.gmra.mrb[0].mxu0 %v719
        %v755 = vpop.f32.mrb[0].mxu0
        %v756 = vadd.f32 %v704, %v755
        %v757 = vpop.f32.mrb[0].mxu0
        %v758 = vpop.f32.mrb[0].mxu0
        %v759 = vpop.f32.mrb[0].mxu0
        %760 = vdwg.mxu0
        %v761 = vmax.f32 %v756, 0.0
        %v762 = vsel %vm416, %v761, 0.0
        %763 = vadd.xlane.f32.xlu0 %v762
        %v764 = vpop.xlane.xlu0 %763
        %v765 = vrcp.pop 32.0
        %v766 = vmul.f32 %v764, %v765
        %v767 = vsub.f32 %v761, %v766
        %v768 = vmul.f32 %v767, %v767
        %v769 = vsel %vm416, %v768, 0.0
        %770 = vadd.xlane.f32.xlu0 %v769
        %v771 = vpop.xlane.xlu0 %770
        %v772 = vrcp.pop 31.0
        %v773 = vmul.f32 %v771, %v772
        %v774 = vrsqrt.pop %v773
        %v775 = vmul.f32 %v773, %v774
        %vm776 = vcmp.eq.f32.partialorder %v773, inf
        %v777 = vsel %vm776, %v773, %v775
        %vm778 = vcmp.eq.f32.partialorder %v773, 0.0
        %v779 = vand.u32 %v773, 2147483648
        %v780 = vsel %vm778, %v779, %v777
        %v781 = vadd.f32 %v780, 1e-06
        %v782 = vrcp.pop %v781
        %v783 = vmul.f32 1.0, %v782
        %v784 = vld [vmem:[%s7] sm:$0x1]
        %v786 = vlaneseq
        %v787 = vshrl.u32 %v786, 7
        %v788 = vsub.s32 0, %v787
        %v789 = vrot.slane %v784, %v788
        %v791 = vmul.f32 %v789, %v767
        %v792 = vmul.f32 %v791, %v783
        %v793 = vld [vmem:[%s8] sm:$0x1]
        %v795 = vlaneseq
        %v796 = vshrl.u32 %v795, 7
        %v797 = vsub.s32 0, %v796
        %v798 = vrot.slane %v793, %v797
        %v800 = vadd.f32 %v792, %v798
        %v802 = vrot.slane %v800, 1
        %803 = vrot.lane.b32.xlu0 %v802, 32
        %v804 = vpop.permute.xlu0 %803
        %v806 = vrot.slane %v800, 2
        %807 = vrot.lane.b32.xlu0 %v806, 64
        %v808 = vpop.permute.xlu0 %807
        %v810 = vrot.slane %v800, 3
        %811 = vrot.lane.b32.xlu0 %v810, 96
        %v812 = vpop.permute.xlu0 %811
        %v814 = vrot.slane %v800, 4
        %v816 = vrot.slane %v800, 5
        %817 = vrot.lane.b32.xlu0 %v816, 32
        %v818 = vpop.permute.xlu0 %817
        %v820 = vrot.slane %v800, 6
        %821 = vrot.lane.b32.xlu0 %v820, 64
        %v822 = vpop.permute.xlu0 %821
        %v824 = vrot.slane %v800, 7
        %825 = vrot.lane.b32.xlu0 %v824, 96
        %v826 = vpop.permute.xlu0 %825
        %v828 = vsel %vm416, %v800, %v804
        %vm829 = vcmask 523264
        %v830 = vsel %vm829, %v828, %v808
        %vm831 = vcmask 785408
        %v832 = vsel %vm831, %v830, %v812
        %v833 = vsel %vm416, %v814, %v818
        %v834 = vsel %vm829, %v833, %v822
        %v835 = vsel %vm831, %v834, %v826
        %v838 = vcombine.low %v832, %v835
        %v840 = vunpack.c.l.s4 1966171168
        %v841 = vunpack.c.0.s8 %v840
        %v842 = vlaneseq
        %v843 = vshrl.u32 %v842, 7
        %v844 = vsub.s32 %v841, %v843
        %v845 = vrot.slane %v838, %v844
        %v847 = vunpack.c.l.s4 1966171168
        %v848 = vunpack.c.0.s8 %v847
        %v849 = vlaneseq
        %v850 = vshrl.u32 %v849, 7
        %v851 = vsub.s32 %v848, %v850
        %v852 = vrot.slane %v845, %v851
        %v854 = vlaneseq
        %vm855 = vcmp.ge.s32.totalorder %v854, 0
        %vm856 = vcmp.lt.s32.totalorder %v854, 256
        %vm857 = vmand %vm855, %vm856
        %858 = vst.msk [vmem:[%s387] sm:$0x3] %vm857, %v852
        %s859 = sand.u32 %s230, 1
        %s860 = scalar_lea.sflag [#allocation4], %s859
        %s861 = sand.u32 %s230, 1
        %s862 = smul.addr %s861, 2
        %s863 = scalar_lea.vmem [#allocation10], %s862
        // Predicated region
        $region73: #{tpu_custom_call.1} parent=55 // pred_check
          %p864 = pneg %p240
        $region74: #{tpu_custom_call.1} parent=55 // pred_check_branch
          %866 = sbr.rel (%p864) target = $region76
        $region75: #{tpu_custom_call.1} parent=55 // pred_region
          %s868 = ssub.s32 32, 32
          %869 = vsyncadd %s860, %s868
          %s870 = smul.addr %s28, 2
          %s871 = smul.addr %s870, 16
          %s872 = scalar_lea.hbm %s9, %s871
          %s874 = sshll.u32 %s863, 4
          %s875 = int_to_ptr.vmem [resolvable:$true] %s874
          %877 = dma.vmem_to_hbm [thread:$0]  %s875, 32, %s872, %s860
        $region76: #{tpu_custom_call.1} parent=55 // pred_fallthru
          _
      $region56: #{tpu_custom_call.1} parent=5 // pred_fallthru
        _
      %p878 = scmp.le.s32.totalorder 2, %s23
      // Predicated region
      $region77: #{tpu_custom_call.1} parent=5 // pred_check
        %p879 = pneg %p878
      $region78: #{tpu_custom_call.1} parent=5 // pred_check_branch
        %881 = sbr.rel (%p879) target = $region80
      $region79: #{tpu_custom_call.1} parent=5 // pred_region
        %s882 = ssub.s32 %s23, 2
        // Predicated region
        $region81: #{tpu_custom_call.1} parent=79 // pred_check
          %p883 = pneg %p246
        $region82: #{tpu_custom_call.1} parent=79 // pred_check_branch
          %885 = sbr.rel (%p883) target = $region84
        $region83: #{tpu_custom_call.1} parent=79 // pred_region
          %s886 = sand.u32 %s231, 1
          %s887 = scalar_lea.sflag [#allocation4], %s886
          %s888 = sand.u32 %s231, 1
          %s889 = smul.addr %s888, 2
          %s890 = scalar_lea.vmem [#allocation10], %s889
          %891 = dma.done %s887, 32
        $region84: #{tpu_custom_call.1} parent=79 // pred_fallthru
          _
      $region80: #{tpu_custom_call.1} parent=5 // pred_fallthru
        _
    $region6: #{tpu_custom_call.1} parent=1 // loop_footer
      %s27 = sadd.s32 1, %s23
    $region7: #{tpu_custom_call.1} parent=1 // loop_footer_branch
      %22 = sbr.rel target = $region3
    $region8: #{tpu_custom_call.1} parent=1 // loop_exit
      _
    %892 = vsyncpa [#allocation3], 1
    %s893 = scalar_lea.sflag [#allocation3], 1
    %894 = vsyncpa %s893, 1
    %895 = vsyncpa [#allocation6], 1
    %896 = vsyncpa [#allocation9], 1
    %897 = vsyncpa [#allocation4], 1
    %s898 = scalar_lea.sflag [#allocation4], 1
    %899 = vsyncpa %s898, 1

</llo_original>
